<compile_context>
chip_gen: v7x
topology: tpu7x:2x2x1
jax: 0.10.0
libtpu: 0.0.40
codegen_flags: <defaults>
</compile_context>

<pallas_src>
import functools

import jax
import jax.numpy as jnp
from jax.experimental import pallas as pl
from jax.experimental.pallas import tpu as pltpu


def _round_up(v: int, m: int) -> int:
    return ((v + m - 1) // m) * m


def _pick_tile(padded: int, base: int, max_tile: int) -> int:
    """Largest tile = base*d such that d divides (padded // base) and base*d <= max_tile."""
    q = padded // base
    best_d = 1
    for d in range(1, q + 1):
        if q % d == 0 and base * d <= max_tile:
            best_d = d
    return base * best_d


def _matmul_kernel_single_k(x_ref, y_ref, o_ref):
    # Whole reduction dim fits one tile: no accumulator, no K grid axis, one store.
    o_ref[...] = jnp.dot(
        x_ref[...], y_ref[...], preferred_element_type=jnp.float32
    ).astype(o_ref.dtype)


def _matmul_kernel_acc(x_ref, y_ref, o_ref, acc_ref):
    # Canonical P1 + P3 accumulator pattern for multi-step K reduction.
    @pl.when(pl.program_id(2) == 0)
    def _init():
        acc_ref[...] = jnp.zeros_like(acc_ref)

    acc_ref[...] += jnp.dot(
        x_ref[...], y_ref[...], preferred_element_type=jnp.float32
    )

    @pl.when(pl.program_id(2) == pl.num_programs(2) - 1)
    def _store():
        o_ref[...] = acc_ref[...].astype(o_ref.dtype)


@functools.partial(
    jax.jit,
    static_argnames=("tm_max", "tn_max", "tk_single_max", "tk_max", "use_bf16_inputs"),
)
def simple_matmul(
    x: jax.Array,
    y: jax.Array,
    *,
    tm_max: int = 512,
    tn_max: int = 512,
    tk_single_max: int = 2048,  # collapse K to a single step up to this depth
    tk_max: int = 1024,         # tile depth when K must be streamed
    use_bf16_inputs: bool = False,
) -> jax.Array:
    """Pallas equivalent of SimpleMatMulModel.forward(x, y) for 2-D inputs."""
    assert x.ndim == 2 and y.ndim == 2, "SimpleMatMulModel test path uses 2-D matmul"
    M, K = x.shape
    K2, N = y.shape
    assert K == K2, f"inner dims must match, got {K} vs {K2}"
    out_dtype = jnp.result_type(x.dtype, y.dtype)

    # Minimal (8, 128)-aligned padded problem size.
    Mp = _round_up(M, 8)
    Np = _round_up(N, 128)
    Kp = _round_up(K, 128)

    # --- Tile selection: tiles always divide the padded dims exactly. ---
    tm = _pick_tile(Mp, 8, tm_max)
    tn = _pick_tile(Np, 128, tn_max)
    if Kp <= tk_single_max:
        tk = Kp            # single K step -> accumulator-free kernel
    else:
        tk = _pick_tile(Kp, 128, tk_max)

    # Megacore / v7x: make sure there are >= 2 output tiles on the parallel axes
    # whenever the problem is big enough to split.
    if (Mp // tm) * (Np // tn) == 1:
        if Mp >= 16:
            tm = _pick_tile(Mp, 8, max(8, tm // 2))
        elif Np >= 256:
            tn = _pick_tile(Np, 128, max(128, tn // 2))

    grid_m, grid_n, grid_k = Mp // tm, Np // tn, Kp // tk
    single_k = grid_k == 1

    # Optional bf16 inputs with f32 accumulation (v6e/v7x MXU-native, halves input bytes).
    in_dtype = jnp.bfloat16 if use_bf16_inputs else x.dtype
    xc = x.astype(in_dtype) if use_bf16_inputs else x
    yc = y.astype(in_dtype) if use_bf16_inputs else y

    # Zero-pad only to the 8/128-aligned size; zeros along K are exact.
    xp = xc if (Mp == M and Kp == K) else jnp.pad(xc, ((0, Mp - M), (0, Kp - K)))
    yp = yc if (Kp == K and Np == N) else jnp.pad(yc, ((0, Kp - K), (0, Np - N)))

    in_itemsize = jnp.dtype(in_dtype).itemsize
    out_itemsize = jnp.dtype(out_dtype).itemsize
    # Operands are re-streamed across the non-matching parallel axis.
    bytes_accessed = (
        in_itemsize * grid_n * Mp * Kp
        + in_itemsize * grid_m * Kp * Np
        + out_itemsize * Mp * Np
    )
    cost = pl.CostEstimate(
        flops=2 * Mp * Np * Kp, transcendentals=0, bytes_accessed=bytes_accessed
    )

    # VMEM budget: double-buffered input tiles + double-buffered output + f32 acc.
    vmem_needed = (
        2 * (tm * tk + tk * tn) * in_itemsize
        + 2 * tm * tn * out_itemsize
        + tm * tn * 4
    )
    vmem_limit = int(min(48 * 1024 * 1024, max(32 * 1024 * 1024, vmem_needed * 3 // 2)))

    if single_k:
        grid = (grid_m, grid_n)
        in_specs = [
            pl.BlockSpec((tm, Kp), lambda i, j: (i, 0)),
            pl.BlockSpec((Kp, tn), lambda i, j: (0, j)),
        ]
        out_specs = pl.BlockSpec((tm, tn), lambda i, j: (i, j))
        scratch_shapes = []
        kernel = _matmul_kernel_single_k
        dim_sem = ("parallel", "parallel")
    else:
        grid = (grid_m, grid_n, grid_k)
        in_specs = [
            pl.BlockSpec((tm, tk), lambda i, j, k: (i, k)),
            pl.BlockSpec((tk, tn), lambda i, j, k: (k, j)),
        ]
        out_specs = pl.BlockSpec((tm, tn), lambda i, j, k: (i, j))
        scratch_shapes = [pltpu.VMEM((tm, tn), jnp.float32)]
        kernel = _matmul_kernel_acc
        dim_sem = ("parallel", "parallel", "arbitrary")

    out_padded = pl.pallas_call(
        kernel,
        out_shape=jax.ShapeDtypeStruct((Mp, Np), out_dtype),
        grid_spec=pltpu.PrefetchScalarGridSpec(
            num_scalar_prefetch=0,
            grid=grid,
            in_specs=in_specs,
            out_specs=out_specs,
            scratch_shapes=scratch_shapes,
        ),
        compiler_params=pltpu.CompilerParams(
            dimension_semantics=dim_sem,
            vmem_limit_bytes=vmem_limit,
        ),
        cost_estimate=cost,
    )(xp, yp)

    if Mp == M and Np == N:
        return out_padded
    return out_padded[:M, :N]


if __name__ == "__main__":
    key = jax.random.PRNGKey(0)
    kx, ky, kx2, ky2 = jax.random.split(key, 4)

    # Small shapes implied by the module: seq=8 x hidden=32 times hidden=32 x out=16.
    M, K, N = 8, 32, 16
    x = jax.random.normal(kx, (M, K), dtype=jnp.float32)
    y = jax.random.normal(ky, (K, N), dtype=jnp.float32)

    out = simple_matmul(x, y)
    jax.block_until_ready(out)

    ref = jnp.matmul(x, y)
    assert out.shape == (M, N)
    assert jnp.allclose(out, ref, atol=1e-5, rtol=1e-5)

    # Larger ragged case: exercises divisor-based tiling (tm=152, tn=256, tk=Kp=640,
    # single-K fast path, 2 parallel M tiles for megacore/v7x).
    M2, K2, N2 = 300, 520, 200
    x2 = jax.random.normal(kx2, (M2, K2), dtype=jnp.float32)
    y2 = jax.random.normal(ky2, (K2, N2), dtype=jnp.float32)
    out2 = simple_matmul(x2, y2)
    jax.block_until_ready(out2)
    ref2 = jnp.matmul(x2, y2)
    assert out2.shape == (M2, N2)
    assert jnp.allclose(out2, ref2, atol=1e-4, rtol=1e-4)

    print("KERNEL_OK")
</pallas_src>

<mosaic_0001>
module attributes {stable_mosaic.version = 11 : i64} {
  func.func @_matmul_kernel_single_k(%arg0: i32, %arg1: i32, %arg2: memref<8x128xf32, #tpu.memory_space<vmem>>, %arg3: memref<128x128xf32, #tpu.memory_space<vmem>>, %arg4: memref<8x128xf32, #tpu.memory_space<vmem>>) attributes {dimension_semantics = [#tpu.dimension_semantics<parallel>, #tpu.dimension_semantics<parallel>], iteration_bounds = array<i64: 1, 1>, scalar_prefetch = 0 : i64, scratch_operands = 0 : i64, tpu.core_type = #tpu.core_type<tc>, window_params = [{transform_indices = @transform_0, window_bounds = array<i64: 8, 128>}, {transform_indices = @transform_1, window_bounds = array<i64: 128, 128>}, {transform_indices = @transform_2, window_bounds = array<i64: 8, 128>}]} {
    %c0 = arith.constant 0 : index
    %c0_0 = arith.constant 0 : index
    %0 = vector.load %arg2[%c0, %c0_0] : memref<8x128xf32, #tpu.memory_space<vmem>>, vector<8x128xf32>
    %c0_1 = arith.constant 0 : index
    %c0_2 = arith.constant 0 : index
    %1 = vector.load %arg3[%c0_1, %c0_2] : memref<128x128xf32, #tpu.memory_space<vmem>>, vector<128x128xf32>
    %cst = arith.constant dense<0.000000e+00> : vector<8x128xf32>
    %2 = tpu.matmul %0, %1, %cst {dimension_numbers = #tpu.dot_dimension_numbers<[1], [0], [0], [1], [0, 0, 1, 1], [], []>} : vector<8x128xf32>, vector<128x128xf32>, vector<8x128xf32> -> vector<8x128xf32>
    %c0_3 = arith.constant 0 : index
    %c0_4 = arith.constant 0 : index
    %3 = vector.load %arg4[%c0_3, %c0_4] : memref<8x128xf32, #tpu.memory_space<vmem>>, vector<8x128xf32>
    tpu.vector_store %arg4[%c0_3, %c0_4], %2 {strides = array<i32>} : memref<8x128xf32, #tpu.memory_space<vmem>>, vector<8x128xf32>,
    return
  }
  func.func @transform_0(%arg0: i32, %arg1: i32) -> (i32, i32) {
    %c0_i32 = arith.constant 0 : i32
    %c0_i32_0 = arith.constant 0 : i32
    return %arg0, %c0_i32 : i32, i32
  }
  func.func @transform_1(%arg0: i32, %arg1: i32) -> (i32, i32) {
    %c0_i32 = arith.constant 0 : i32
    %c0_i32_0 = arith.constant 0 : i32
    return %c0_i32, %arg1 : i32, i32
  }
  func.func @transform_2(%arg0: i32, %arg1: i32) -> (i32, i32) {
    %c0_i32 = arith.constant 0 : i32
    return %arg0, %arg1 : i32, i32
  }
}

</mosaic_0001>

<llo_original>
// kernel: simple_matmul.1
$region0: #{simple_matmul.1}
  #allocation0 [shape = 'u32[]', space=smem, size = 0x4, offset = 0x4, fixed_abs, tag = 'smem constant byte address 0x4 - core index']
  #allocation1 [shape = 'u32[144,128]{1,0:T(1,128)}', space=vmem, size = 0x12000, scoped, tag = 'internal scratch']
  %s0 = inlined_call_operand.vmem [shape: f32[8,128], index: 0, kind: input, shape index: {}]
  %s1 = inlined_call_operand.vmem [shape: f32[128,128], index: 1, kind: input, shape index: {}]
  %s2 = inlined_call_operand.hbm [shape: f32[8,128], index: 2, kind: output, shape index: {}]
  %s3 = sld [smem:[#allocation0]]
  $region18: #{simple_matmul.1} parent=0
    _
  %s5 = ssub.s32 1, %s3
  %s6 = scalar_select 0, %s5, %s3
  $region1: #{simple_matmul.1} parent=0
    #allocation2 [shape = 'u8[4096]{0}', space=vmem, size = 0x1000, scoped, tag = 'output window, operand 0, single buffered']
    #allocation3 [shape = 's32[1]{0}', space=sflag, size = 0x4, scoped, tag = 'scoped memory for simple_matmul.1']
    %7 = vsyncpa [#allocation3], 0
    // Predicated region
    $region2: #{simple_matmul.1} parent=1 // pred_check
      _
    $region3: #{simple_matmul.1} parent=1 // pred_check_branch
      %9 = sbr.rel (0) target = $region5
    $region4: #{simple_matmul.1} parent=1 // pred_region
      _
    $region5: #{simple_matmul.1} parent=1 // pred_fallthru
      _
    // Predicated region
    $region6: #{simple_matmul.1} parent=1 // pred_check
      _
    $region7: #{simple_matmul.1} parent=1 // pred_check_branch
      %11 = sbr.rel (0) target = $region9
    $region8: #{simple_matmul.1} parent=1 // pred_region
      _
    $region9: #{simple_matmul.1} parent=1 // pred_fallthru
      _
    %v12 = vld [vmem:[%s0] sm:$0xff]
    %v13 = vld [vmem:[%s1] sm:$0xff]
    %v14 = vld [vmem:[%s1 + $0x8] sm:$0xff]
    %v15 = vld [vmem:[%s1 + $0x10] sm:$0xff]
    %v16 = vld [vmem:[%s1 + $0x18] sm:$0xff]
    %v17 = vld [vmem:[%s1 + $0x20] sm:$0xff]
    %v18 = vld [vmem:[%s1 + $0x28] sm:$0xff]
    %v19 = vld [vmem:[%s1 + $0x30] sm:$0xff]
    %v20 = vld [vmem:[%s1 + $0x38] sm:$0xff]
    %v21 = vld [vmem:[%s1 + $0x40] sm:$0xff]
    %v22 = vld [vmem:[%s1 + $0x48] sm:$0xff]
    %v23 = vld [vmem:[%s1 + $0x50] sm:$0xff]
    %v24 = vld [vmem:[%s1 + $0x58] sm:$0xff]
    %v25 = vld [vmem:[%s1 + $0x60] sm:$0xff]
    %v26 = vld [vmem:[%s1 + $0x68] sm:$0xff]
    %v27 = vld [vmem:[%s1 + $0x70] sm:$0xff]
    %v28 = vld [vmem:[%s1 + $0x78] sm:$0xff]
    %29 = vmatprep.subr.mxu0 0.0
    %30 = vmatpush1.msra.mxu0 %v13
    %31 = vmatprep.subr.mxu0 0.0
    %32 = vmatpush1.msra.mxu0 %v14
    %33 = vmatprep.subr.mxu0 0.0
    %34 = vmatpush1.msra.mxu0 %v15
    %35 = vmatprep.subr.mxu0 0.0
    %36 = vmatpush1.msra.mxu0 %v16
    %37 = vmatprep.subr.mxu0 0.0
    %38 = vmatpush1.msra.mxu0 %v17
    %39 = vmatprep.subr.mxu0 0.0
    %40 = vmatpush1.msra.mxu0 %v18
    %41 = vmatprep.subr.mxu0 0.0
    %42 = vmatpush1.msra.mxu0 %v19
    %43 = vmatprep.subr.mxu0 0.0
    %44 = vmatpush1.msra.mxu0 %v20
    %45 = vmatprep.subr.mxu0 0.0
    %46 = vmatpush1.msra.mxu0 %v21
    %47 = vmatprep.subr.mxu0 0.0
    %48 = vmatpush1.msra.mxu0 %v22
    %49 = vmatprep.subr.mxu0 0.0
    %50 = vmatpush1.msra.mxu0 %v23
    %51 = vmatprep.subr.mxu0 0.0
    %52 = vmatpush1.msra.mxu0 %v24
    %53 = vmatprep.subr.mxu0 0.0
    %54 = vmatpush1.msra.mxu0 %v25
    %55 = vmatprep.subr.mxu0 0.0
    %56 = vmatpush1.msra.mxu0 %v26
    %57 = vmatprep.subr.mxu0 0.0
    %58 = vmatpush1.msra.mxu0 %v27
    %59 = vmatprep.subr.mxu0 0.0
    %60 = vmatpush1.msra.mxu0 %v28
    %61 = vmatprep.subr.mxu0 0.0
    %62 = vmatpush1.msra.mxu0 0.0
    %63 = vmatprep.subr.mxu0 0.0
    %64 = vmatpush1.msra.mxu0 0.0
    %65 = vmatprep.subr.mxu0 0.0
    %66 = vmatpush1.msra.mxu0 0.0
    %67 = vmatprep.subr.mxu0 0.0
    %68 = vmatpush1.msra.mxu0 0.0
    %69 = vmatprep.subr.mxu0 0.0
    %70 = vmatpush1.msra.mxu0 0.0
    %71 = vmatprep.subr.mxu0 0.0
    %72 = vmatpush1.msra.mxu0 0.0
    %73 = vmatprep.subr.mxu0 0.0
    %74 = vmatpush1.msra.mxu0 0.0
    %75 = vmatprep.subr.mxu0 0.0
    %76 = vmatpush1.msra.mxu0 0.0
    %77 = vmatprep.subr.mxu0 0.0
    %78 = vmatpush1.msra.mxu0 0.0
    %79 = vmatprep.subr.mxu0 0.0
    %80 = vmatpush1.msra.mxu0 0.0
    %81 = vmatprep.subr.mxu0 0.0
    %82 = vmatpush1.msra.mxu0 0.0
    %83 = vmatprep.subr.mxu0 0.0
    %84 = vmatpush1.msra.mxu0 0.0
    %85 = vmatprep.subr.mxu0 0.0
    %86 = vmatpush1.msra.mxu0 0.0
    %87 = vmatprep.subr.mxu0 0.0
    %88 = vmatpush1.msra.mxu0 0.0
    %89 = vmatprep.subr.mxu0 0.0
    %90 = vmatpush1.msra.mxu0 0.0
    %91 = vmatprep.subr.mxu0 0.0
    %92 = vmatpush1.msra.mxu0 0.0
    %93 = vmatprep.mubr.f32.mxu0 0.0
    %94 = vmatmul.mubr.f32.gmra.mrb[0].mxu0 %v12
    %v95 = vpop.f32.mrb[0].mxu0
    %v96 = vadd.f32 0.0, %v95
    %v97 = vpop.f32.mrb[0].mxu0
    %98 = vdwg.mxu0
    %99 = vst [vmem:[#allocation2] sm:$0xff] %v96
    // Predicated region
    $region10: #{simple_matmul.1} parent=1 // pred_check
      _
    $region11: #{simple_matmul.1} parent=1 // pred_check_branch
      %101 = sbr.rel (0) target = $region13
    $region12: #{simple_matmul.1} parent=1 // pred_region
      %s103 = ssub.s32 128, 128
      %104 = vsyncadd [#allocation3], %s103
      %s106 = sshll.u32 [#allocation2], 4
      %s107 = int_to_ptr.vmem [resolvable:$true] %s106
      %109 = dma.vmem_to_hbm [thread:$0]  %s107, 128, %s2, [#allocation3]
    $region13: #{simple_matmul.1} parent=1 // pred_fallthru
      _
    // Predicated region
    $region14: #{simple_matmul.1} parent=1 // pred_check
      _
    $region15: #{simple_matmul.1} parent=1 // pred_check_branch
      %111 = sbr.rel (0) target = $region17
    $region16: #{simple_matmul.1} parent=1 // pred_region
      %112 = dma.done [#allocation3], 128
    $region17: #{simple_matmul.1} parent=1 // pred_fallthru
      _
    %113 = vsyncpa [#allocation3], 1

</llo_original>
